<compile_context>
chip_gen: v7x
topology: tpu7x:2x2x1
jax: 0.10.0
libtpu: 0.0.40
codegen_flags: <defaults>
</compile_context>

<pallas_src>
import jax
import jax.numpy as jnp
from jax import lax
from jax.experimental import pallas as pl
from jax.experimental.pallas import tpu as pltpu


_LANE = 128
_CHUNK_ROWS = 8          # sublane rows processed per inner-loop step
_MAX_BLOCK_ROWS = 512    # 512 x 512 f32 = 1 MiB per x / out block
_MAX_BLOCK_LANES = 512


def _round_up(x, m):
    return ((x + m - 1) // m) * m


def _make_mlp_kernel(h_units, chunk_rows, num_chunks):
    """Builds the kernel with static hidden size / chunking baked in."""

    def kernel(x_ref, w1_ref, b1_ref, w2_ref, b2_ref, o_ref):
        # Hoist all parameter scalars out of the chunk loop (SMEM -> sregs).
        w1s = [w1_ref[h] for h in range(h_units)]
        b1s = [b1_ref[h] for h in range(h_units)]
        w2s = [w2_ref[h] for h in range(h_units)]
        b2 = b2_ref[0]

        def process(r0):
            x = x_ref[pl.ds(r0, chunk_rows), :]            # dense (chunk_rows, lanes)
            acc = jnp.full(x.shape, b2, dtype=jnp.float32)  # start from output bias
            for h in range(h_units):                        # H is small & static
                acc = acc + w2s[h] * jnp.maximum(w1s[h] * x + b1s[h], 0.0)
            o_ref[pl.ds(r0, chunk_rows), :] = acc           # full-vreg dense store

        if num_chunks == 1:
            process(0)
        else:
            def body(c, carry):
                process(pl.multiple_of(c * chunk_rows, chunk_rows))
                return carry
            lax.fori_loop(0, num_chunks, body, 0, unroll=False)

    return kernel


def red_neuronal_forward(x, w1, b1, w2, b2):
    """Forward pass of Linear(1,H) -> ReLU -> Linear(H,1).

    x: (N, 1) f32; w1: (1, H); b1: (H,); w2: (H, 1); b2: (1,). Returns (N, 1).
    """
    n = x.shape[0]
    h_units = w1.shape[1]

    # ---- tile selection: batch dense on sublanes AND lanes --------------------
    if n <= _LANE:
        lanes = _LANE
    else:
        # Aim for >= ~16 rows when the batch allows it; lanes multiple of 128.
        lanes = min(_MAX_BLOCK_LANES, max(_LANE, (n // (16 * _LANE)) * _LANE))
    n_pad = _round_up(n, lanes)
    rows = n_pad // lanes

    if rows <= _CHUNK_ROWS:
        block_rows = rows                       # single block; dim == full array dim
    else:
        # Target ~8 grid steps (keeps both v7x TCs busy) while keeping blocks
        # a multiple of 8 rows and <= ~1 MiB.
        block_rows = min(_MAX_BLOCK_ROWS,
                         max(_CHUNK_ROWS, _round_up(pl.cdiv(rows, 8), _CHUNK_ROWS)))
    grid = pl.cdiv(rows, block_rows)

    chunk_rows = min(block_rows, _CHUNK_ROWS)
    num_chunks = block_rows // chunk_rows

    # ---- host-side staging -----------------------------------------------------
    x_flat = jnp.reshape(x.astype(jnp.float32), (n,))
    if n_pad != n:
        # Minimal pad (< lanes elements) so the 2D reshape is exact; the ragged
        # trailing grid block is handled by Pallas OOB masking, not by padding.
        x_flat = jnp.pad(x_flat, (0, n_pad - n))
    x2 = x_flat.reshape(rows, lanes)

    w1_s = jnp.reshape(w1, (h_units,)).astype(jnp.float32)
    b1_s = jnp.reshape(b1, (h_units,)).astype(jnp.float32)
    w2_s = jnp.reshape(w2, (h_units,)).astype(jnp.float32)
    b2_s = jnp.reshape(b2, (1,)).astype(jnp.float32)

    kernel = _make_mlp_kernel(h_units, chunk_rows, num_chunks)

    out = pl.pallas_call(
        kernel,
        out_shape=jax.ShapeDtypeStruct((rows, lanes), jnp.float32),
        grid=(grid,),
        in_specs=[
            pl.BlockSpec((block_rows, lanes), lambda i: (i, 0)),  # x block (dense)
            pl.BlockSpec(memory_space=pltpu.MemorySpace.SMEM),    # w1 scalars
            pl.BlockSpec(memory_space=pltpu.MemorySpace.SMEM),    # b1 scalars
            pl.BlockSpec(memory_space=pltpu.MemorySpace.SMEM),    # w2 scalars
            pl.BlockSpec(memory_space=pltpu.MemorySpace.SMEM),    # b2 scalar
        ],
        out_specs=pl.BlockSpec((block_rows, lanes), lambda i: (i, 0)),
        compiler_params=pltpu.CompilerParams(
            dimension_semantics=("parallel",)),
    )(x2, w1_s, b1_s, w2_s, b2_s)

    return out.reshape(n_pad)[:n].reshape(n, 1)


def init_params(key, num_neuronas):
    """Deterministic init mimicking nn.Linear's U(-1/sqrt(fan_in), 1/sqrt(fan_in))."""
    k1, k2, k3, k4 = jax.random.split(key, 4)
    bound1 = 1.0  # fan_in = 1
    w1 = jax.random.uniform(k1, (1, num_neuronas), jnp.float32, -bound1, bound1)
    b1 = jax.random.uniform(k2, (num_neuronas,), jnp.float32, -bound1, bound1)
    bound2 = 1.0 / jnp.sqrt(jnp.float32(num_neuronas))
    w2 = jax.random.uniform(k3, (num_neuronas, 1), jnp.float32, -bound2, bound2)
    b2 = jax.random.uniform(k4, (1,), jnp.float32, -bound2, bound2)
    return w1, b1, w2, b2


def _reference(x, w1, b1, w2, b2):
    return jnp.maximum(x @ w1 + b1[None, :], 0.0) @ w2 + b2[None, :]


if __name__ == "__main__":
    key = jax.random.PRNGKey(0)
    num_neuronas = 10          # default slider value in the original script

    kx, kp, kx2 = jax.random.split(key, 3)
    w1, b1, w2, b2 = init_params(kp, num_neuronas)

    # Small case (single block path), matching the original module's usage.
    batch = 8
    x = jax.random.normal(kx, (batch, 1), jnp.float32)
    y = jax.block_until_ready(red_neuronal_forward(x, w1, b1, w2, b2))
    ref = _reference(x, w1, b1, w2, b2)
    assert y.shape == (batch, 1)
    assert jnp.allclose(y, ref, atol=1e-5, rtol=1e-5)

    # Slightly larger, unaligned case: exercises multi-block grid + masked
    # ragged trailing block (still tiny).
    batch2 = 1200
    x2 = jax.random.normal(kx2, (batch2, 1), jnp.float32)
    y2 = jax.block_until_ready(red_neuronal_forward(x2, w1, b1, w2, b2))
    ref2 = _reference(x2, w1, b1, w2, b2)
    assert y2.shape == (batch2, 1)
    assert jnp.allclose(y2, ref2, atol=1e-5, rtol=1e-5)

    print("KERNEL_OK")
</pallas_src>

<mosaic_0001>
module attributes {stable_mosaic.version = 11 : i64} {
  func.func @kernel(%arg0: i32, %arg1: memref<1x128xf32, #tpu.memory_space<vmem>>, %arg2: memref<10xf32, #tpu.memory_space<smem>>, %arg3: memref<10xf32, #tpu.memory_space<smem>>, %arg4: memref<10xf32, #tpu.memory_space<smem>>, %arg5: memref<1xf32, #tpu.memory_space<smem>>, %arg6: memref<1x128xf32, #tpu.memory_space<vmem>>) attributes {dimension_semantics = [#tpu.dimension_semantics<parallel>], iteration_bounds = array<i64: 1>, scalar_prefetch = 0 : i64, scratch_operands = 0 : i64, tpu.core_type = #tpu.core_type<tc>, window_params = [{transform_indices = @transform_0, window_bounds = array<i64: 1, 128>}, {transform_indices = @transform_1, window_bounds = array<i64: 10>}, {transform_indices = @transform_2, window_bounds = array<i64: 10>}, {transform_indices = @transform_3, window_bounds = array<i64: 10>}, {transform_indices = @transform_4, window_bounds = array<i64: 1>}, {transform_indices = @transform_5, window_bounds = array<i64: 1, 128>}]} {
    %c0 = arith.constant 0 : index
    %0 = memref.load %arg2[%c0] : memref<10xf32, #tpu.memory_space<smem>>
    %c1 = arith.constant 1 : index
    %1 = memref.load %arg2[%c1] : memref<10xf32, #tpu.memory_space<smem>>
    %c2 = arith.constant 2 : index
    %2 = memref.load %arg2[%c2] : memref<10xf32, #tpu.memory_space<smem>>
    %c3 = arith.constant 3 : index
    %3 = memref.load %arg2[%c3] : memref<10xf32, #tpu.memory_space<smem>>
    %c4 = arith.constant 4 : index
    %4 = memref.load %arg2[%c4] : memref<10xf32, #tpu.memory_space<smem>>
    %c5 = arith.constant 5 : index
    %5 = memref.load %arg2[%c5] : memref<10xf32, #tpu.memory_space<smem>>
    %c6 = arith.constant 6 : index
    %6 = memref.load %arg2[%c6] : memref<10xf32, #tpu.memory_space<smem>>
    %c7 = arith.constant 7 : index
    %7 = memref.load %arg2[%c7] : memref<10xf32, #tpu.memory_space<smem>>
    %c8 = arith.constant 8 : index
    %8 = memref.load %arg2[%c8] : memref<10xf32, #tpu.memory_space<smem>>
    %c9 = arith.constant 9 : index
    %9 = memref.load %arg2[%c9] : memref<10xf32, #tpu.memory_space<smem>>
    %c0_0 = arith.constant 0 : index
    %10 = memref.load %arg3[%c0_0] : memref<10xf32, #tpu.memory_space<smem>>
    %c1_1 = arith.constant 1 : index
    %11 = memref.load %arg3[%c1_1] : memref<10xf32, #tpu.memory_space<smem>>
    %c2_2 = arith.constant 2 : index
    %12 = memref.load %arg3[%c2_2] : memref<10xf32, #tpu.memory_space<smem>>
    %c3_3 = arith.constant 3 : index
    %13 = memref.load %arg3[%c3_3] : memref<10xf32, #tpu.memory_space<smem>>
    %c4_4 = arith.constant 4 : index
    %14 = memref.load %arg3[%c4_4] : memref<10xf32, #tpu.memory_space<smem>>
    %c5_5 = arith.constant 5 : index
    %15 = memref.load %arg3[%c5_5] : memref<10xf32, #tpu.memory_space<smem>>
    %c6_6 = arith.constant 6 : index
    %16 = memref.load %arg3[%c6_6] : memref<10xf32, #tpu.memory_space<smem>>
    %c7_7 = arith.constant 7 : index
    %17 = memref.load %arg3[%c7_7] : memref<10xf32, #tpu.memory_space<smem>>
    %c8_8 = arith.constant 8 : index
    %18 = memref.load %arg3[%c8_8] : memref<10xf32, #tpu.memory_space<smem>>
    %c9_9 = arith.constant 9 : index
    %19 = memref.load %arg3[%c9_9] : memref<10xf32, #tpu.memory_space<smem>>
    %c0_10 = arith.constant 0 : index
    %20 = memref.load %arg4[%c0_10] : memref<10xf32, #tpu.memory_space<smem>>
    %c1_11 = arith.constant 1 : index
    %21 = memref.load %arg4[%c1_11] : memref<10xf32, #tpu.memory_space<smem>>
    %c2_12 = arith.constant 2 : index
    %22 = memref.load %arg4[%c2_12] : memref<10xf32, #tpu.memory_space<smem>>
    %c3_13 = arith.constant 3 : index
    %23 = memref.load %arg4[%c3_13] : memref<10xf32, #tpu.memory_space<smem>>
    %c4_14 = arith.constant 4 : index
    %24 = memref.load %arg4[%c4_14] : memref<10xf32, #tpu.memory_space<smem>>
    %c5_15 = arith.constant 5 : index
    %25 = memref.load %arg4[%c5_15] : memref<10xf32, #tpu.memory_space<smem>>
    %c6_16 = arith.constant 6 : index
    %26 = memref.load %arg4[%c6_16] : memref<10xf32, #tpu.memory_space<smem>>
    %c7_17 = arith.constant 7 : index
    %27 = memref.load %arg4[%c7_17] : memref<10xf32, #tpu.memory_space<smem>>
    %c8_18 = arith.constant 8 : index
    %28 = memref.load %arg4[%c8_18] : memref<10xf32, #tpu.memory_space<smem>>
    %c9_19 = arith.constant 9 : index
    %29 = memref.load %arg4[%c9_19] : memref<10xf32, #tpu.memory_space<smem>>
    %c0_20 = arith.constant 0 : index
    %30 = memref.load %arg5[%c0_20] : memref<1xf32, #tpu.memory_space<smem>>
    %c0_21 = arith.constant 0 : index
    %c0_22 = arith.constant 0 : index
    %31 = vector.load %arg1[%c0_21, %c0_22] : memref<1x128xf32, #tpu.memory_space<vmem>>, vector<1x128xf32>
    %32 = vector.broadcast %30 : f32 to vector<1x128xf32>
    %33 = vector.broadcast %0 : f32 to vector<1x128xf32>
    %34 = arith.mulf %33, %31 : vector<1x128xf32>
    %35 = vector.broadcast %10 : f32 to vector<1x128xf32>
    %36 = arith.addf %34, %35 : vector<1x128xf32>
    %cst = arith.constant 0.000000e+00 : f32
    %37 = vector.broadcast %cst : f32 to vector<1x128xf32>
    %38 = arith.maximumf %36, %37 : vector<1x128xf32>
    %39 = vector.broadcast %20 : f32 to vector<1x128xf32>
    %40 = arith.mulf %39, %38 : vector<1x128xf32>
    %41 = arith.addf %32, %40 : vector<1x128xf32>
    %42 = vector.broadcast %1 : f32 to vector<1x128xf32>
    %43 = arith.mulf %42, %31 : vector<1x128xf32>
    %44 = vector.broadcast %11 : f32 to vector<1x128xf32>
    %45 = arith.addf %43, %44 : vector<1x128xf32>
    %cst_23 = arith.constant 0.000000e+00 : f32
    %46 = vector.broadcast %cst_23 : f32 to vector<1x128xf32>
    %47 = arith.maximumf %45, %46 : vector<1x128xf32>
    %48 = vector.broadcast %21 : f32 to vector<1x128xf32>
    %49 = arith.mulf %48, %47 : vector<1x128xf32>
    %50 = arith.addf %41, %49 : vector<1x128xf32>
    %51 = vector.broadcast %2 : f32 to vector<1x128xf32>
    %52 = arith.mulf %51, %31 : vector<1x128xf32>
    %53 = vector.broadcast %12 : f32 to vector<1x128xf32>
    %54 = arith.addf %52, %53 : vector<1x128xf32>
    %cst_24 = arith.constant 0.000000e+00 : f32
    %55 = vector.broadcast %cst_24 : f32 to vector<1x128xf32>
    %56 = arith.maximumf %54, %55 : vector<1x128xf32>
    %57 = vector.broadcast %22 : f32 to vector<1x128xf32>
    %58 = arith.mulf %57, %56 : vector<1x128xf32>
    %59 = arith.addf %50, %58 : vector<1x128xf32>
    %60 = vector.broadcast %3 : f32 to vector<1x128xf32>
    %61 = arith.mulf %60, %31 : vector<1x128xf32>
    %62 = vector.broadcast %13 : f32 to vector<1x128xf32>
    %63 = arith.addf %61, %62 : vector<1x128xf32>
    %cst_25 = arith.constant 0.000000e+00 : f32
    %64 = vector.broadcast %cst_25 : f32 to vector<1x128xf32>
    %65 = arith.maximumf %63, %64 : vector<1x128xf32>
    %66 = vector.broadcast %23 : f32 to vector<1x128xf32>
    %67 = arith.mulf %66, %65 : vector<1x128xf32>
    %68 = arith.addf %59, %67 : vector<1x128xf32>
    %69 = vector.broadcast %4 : f32 to vector<1x128xf32>
    %70 = arith.mulf %69, %31 : vector<1x128xf32>
    %71 = vector.broadcast %14 : f32 to vector<1x128xf32>
    %72 = arith.addf %70, %71 : vector<1x128xf32>
    %cst_26 = arith.constant 0.000000e+00 : f32
    %73 = vector.broadcast %cst_26 : f32 to vector<1x128xf32>
    %74 = arith.maximumf %72, %73 : vector<1x128xf32>
    %75 = vector.broadcast %24 : f32 to vector<1x128xf32>
    %76 = arith.mulf %75, %74 : vector<1x128xf32>
    %77 = arith.addf %68, %76 : vector<1x128xf32>
    %78 = vector.broadcast %5 : f32 to vector<1x128xf32>
    %79 = arith.mulf %78, %31 : vector<1x128xf32>
    %80 = vector.broadcast %15 : f32 to vector<1x128xf32>
    %81 = arith.addf %79, %80 : vector<1x128xf32>
    %cst_27 = arith.constant 0.000000e+00 : f32
    %82 = vector.broadcast %cst_27 : f32 to vector<1x128xf32>
    %83 = arith.maximumf %81, %82 : vector<1x128xf32>
    %84 = vector.broadcast %25 : f32 to vector<1x128xf32>
    %85 = arith.mulf %84, %83 : vector<1x128xf32>
    %86 = arith.addf %77, %85 : vector<1x128xf32>
    %87 = vector.broadcast %6 : f32 to vector<1x128xf32>
    %88 = arith.mulf %87, %31 : vector<1x128xf32>
    %89 = vector.broadcast %16 : f32 to vector<1x128xf32>
    %90 = arith.addf %88, %89 : vector<1x128xf32>
    %cst_28 = arith.constant 0.000000e+00 : f32
    %91 = vector.broadcast %cst_28 : f32 to vector<1x128xf32>
    %92 = arith.maximumf %90, %91 : vector<1x128xf32>
    %93 = vector.broadcast %26 : f32 to vector<1x128xf32>
    %94 = arith.mulf %93, %92 : vector<1x128xf32>
    %95 = arith.addf %86, %94 : vector<1x128xf32>
    %96 = vector.broadcast %7 : f32 to vector<1x128xf32>
    %97 = arith.mulf %96, %31 : vector<1x128xf32>
    %98 = vector.broadcast %17 : f32 to vector<1x128xf32>
    %99 = arith.addf %97, %98 : vector<1x128xf32>
    %cst_29 = arith.constant 0.000000e+00 : f32
    %100 = vector.broadcast %cst_29 : f32 to vector<1x128xf32>
    %101 = arith.maximumf %99, %100 : vector<1x128xf32>
    %102 = vector.broadcast %27 : f32 to vector<1x128xf32>
    %103 = arith.mulf %102, %101 : vector<1x128xf32>
    %104 = arith.addf %95, %103 : vector<1x128xf32>
    %105 = vector.broadcast %8 : f32 to vector<1x128xf32>
    %106 = arith.mulf %105, %31 : vector<1x128xf32>
    %107 = vector.broadcast %18 : f32 to vector<1x128xf32>
    %108 = arith.addf %106, %107 : vector<1x128xf32>
    %cst_30 = arith.constant 0.000000e+00 : f32
    %109 = vector.broadcast %cst_30 : f32 to vector<1x128xf32>
    %110 = arith.maximumf %108, %109 : vector<1x128xf32>
    %111 = vector.broadcast %28 : f32 to vector<1x128xf32>
    %112 = arith.mulf %111, %110 : vector<1x128xf32>
    %113 = arith.addf %104, %112 : vector<1x128xf32>
    %114 = vector.broadcast %9 : f32 to vector<1x128xf32>
    %115 = arith.mulf %114, %31 : vector<1x128xf32>
    %116 = vector.broadcast %19 : f32 to vector<1x128xf32>
    %117 = arith.addf %115, %116 : vector<1x128xf32>
    %cst_31 = arith.constant 0.000000e+00 : f32
    %118 = vector.broadcast %cst_31 : f32 to vector<1x128xf32>
    %119 = arith.maximumf %117, %118 : vector<1x128xf32>
    %120 = vector.broadcast %29 : f32 to vector<1x128xf32>
    %121 = arith.mulf %120, %119 : vector<1x128xf32>
    %122 = arith.addf %113, %121 : vector<1x128xf32>
    %c0_32 = arith.constant 0 : index
    %c0_33 = arith.constant 0 : index
    %123 = vector.load %arg6[%c0_32, %c0_33] : memref<1x128xf32, #tpu.memory_space<vmem>>, vector<1x128xf32>
    tpu.vector_store %arg6[%c0_32, %c0_33], %122 {strides = array<i32>} : memref<1x128xf32, #tpu.memory_space<vmem>>, vector<1x128xf32>,
    return
  }
  func.func @transform_0(%arg0: i32) -> (i32, i32) {
    %c0_i32 = arith.constant 0 : i32
    %c0_i32_0 = arith.constant 0 : i32
    return %arg0, %c0_i32 : i32, i32
  }
  func.func @transform_1(%arg0: i32) -> i32 {
    %c0_i32 = arith.constant 0 : i32
    %c0_i32_0 = arith.constant 0 : i32
    return %c0_i32 : i32
  }
  func.func @transform_2(%arg0: i32) -> i32 {
    %c0_i32 = arith.constant 0 : i32
    %c0_i32_0 = arith.constant 0 : i32
    return %c0_i32 : i32
  }
  func.func @transform_3(%arg0: i32) -> i32 {
    %c0_i32 = arith.constant 0 : i32
    %c0_i32_0 = arith.constant 0 : i32
    return %c0_i32 : i32
  }
  func.func @transform_4(%arg0: i32) -> i32 {
    %c0_i32 = arith.constant 0 : i32
    %c0_i32_0 = arith.constant 0 : i32
    return %c0_i32 : i32
  }
  func.func @transform_5(%arg0: i32) -> (i32, i32) {
    %c0_i32 = arith.constant 0 : i32
    %c0_i32_0 = arith.constant 0 : i32
    return %arg0, %c0_i32 : i32, i32
  }
}

</mosaic_0001>

<llo_original>
// kernel: tpu_custom_call.1
$region0: #{tpu_custom_call.1}
  #allocation0 [shape = 'u32[]', space=smem, size = 0x4, offset = 0x4, fixed_abs, tag = 'smem constant byte address 0x4 - core index']
  #allocation1 [shape = 'u32[144,128]{1,0:T(1,128)}', space=vmem, size = 0x12000, scoped, tag = 'internal scratch']
  #allocation2 [shape = 'f32[1]{0:T(128)S(6)}', space=smem, size = 0x200, scoped, tag = 'scoped memory for tpu_custom_call.1']
  %s0 = inlined_call_operand.vmem [shape: f32[1,128], index: 0, kind: input, shape index: {}]
  %s1 = inlined_call_operand.vmem [shape: f32[10], index: 1, kind: input, shape index: {}]
  %s2 = inlined_call_operand.vmem [shape: f32[10], index: 2, kind: input, shape index: {}]
  %s3 = inlined_call_operand.vmem [shape: f32[10], index: 3, kind: input, shape index: {}]
  %s4 = inlined_call_operand.<no memory space> [shape: f32[1], index: 4, kind: input, shape index: {}]
  %s5 = inlined_call_operand.hbm [shape: f32[1,128], index: 5, kind: output, shape index: {}]
  %s6 = sld [smem:[#allocation0]]
  $region42: #{tpu_custom_call.1} parent=0
    _
  %s8 = ssub.s32 1, %s6
  %s9 = scalar_select 0, %s8, %s6
  %10 = sst [smem:[#allocation2]] %s4
  $region1: #{tpu_custom_call.1} parent=0
    #allocation3 [shape = 'u8[512]{0}', space=smem, size = 0x200, scoped, tag = 'input window, operand 1, single buffered']
    #allocation4 [shape = 's32[1]{0}', space=sflag, size = 0x4, scoped, tag = 'scoped memory for tpu_custom_call.1']
    #allocation5 [shape = 's32[1]{0}', space=sflag, size = 0x4, scoped, tag = 'scoped memory for tpu_custom_call.1']
    #allocation6 [shape = 'u8[512]{0}', space=smem, size = 0x200, scoped, tag = 'input window, operand 2, single buffered']
    #allocation7 [shape = 's32[1]{0}', space=sflag, size = 0x4, scoped, tag = 'scoped memory for tpu_custom_call.1']
    #allocation8 [shape = 'u8[512]{0}', space=smem, size = 0x200, scoped, tag = 'input window, operand 3, single buffered']
    #allocation9 [shape = 'u8[512]{0}', space=vmem, size = 0x400, scoped, tag = 'output window, operand 0, single buffered']
    %11 = vsyncpa [#allocation5], 0
    %12 = vsyncpa [#allocation7], 0
    %13 = vsyncpa [#allocation4], 0
    // Predicated region
    $region2: #{tpu_custom_call.1} parent=1 // pred_check
      _
    $region3: #{tpu_custom_call.1} parent=1 // pred_check_branch
      %15 = sbr.rel (0) target = $region5
    $region4: #{tpu_custom_call.1} parent=1 // pred_region
      _
    $region5: #{tpu_custom_call.1} parent=1 // pred_fallthru
      _
    // Predicated region
    $region6: #{tpu_custom_call.1} parent=1 // pred_check
      _
    $region7: #{tpu_custom_call.1} parent=1 // pred_check_branch
      %17 = sbr.rel (0) target = $region9
    $region8: #{tpu_custom_call.1} parent=1 // pred_region
      %s19 = ssub.s32 16, 16
      %20 = vsyncadd [#allocation5], %s19
      %s22 = sshll.u32 %s1, 4
      %s23 = int_to_ptr.vmem [resolvable:$true] %s22
      %25 = dma.vmem_to_smem %s23, 16, [#allocation3], [#allocation5]
    $region9: #{tpu_custom_call.1} parent=1 // pred_fallthru
      _
    // Predicated region
    $region10: #{tpu_custom_call.1} parent=1 // pred_check
      _
    $region11: #{tpu_custom_call.1} parent=1 // pred_check_branch
      %27 = sbr.rel (0) target = $region13
    $region12: #{tpu_custom_call.1} parent=1 // pred_region
      %s29 = ssub.s32 16, 16
      %30 = vsyncadd [#allocation7], %s29
      %s32 = sshll.u32 %s2, 4
      %s33 = int_to_ptr.vmem [resolvable:$true] %s32
      %35 = dma.vmem_to_smem %s33, 16, [#allocation6], [#allocation7]
    $region13: #{tpu_custom_call.1} parent=1 // pred_fallthru
      _
    // Predicated region
    $region14: #{tpu_custom_call.1} parent=1 // pred_check
      _
    $region15: #{tpu_custom_call.1} parent=1 // pred_check_branch
      %37 = sbr.rel (0) target = $region17
    $region16: #{tpu_custom_call.1} parent=1 // pred_region
      %s39 = ssub.s32 16, 16
      %40 = vsyncadd [#allocation7], %s39
      %s42 = sshll.u32 %s3, 4
      %s43 = int_to_ptr.vmem [resolvable:$true] %s42
      %45 = dma.vmem_to_smem %s43, 16, [#allocation8], [#allocation7]
    $region17: #{tpu_custom_call.1} parent=1 // pred_fallthru
      _
    // Predicated region
    $region18: #{tpu_custom_call.1} parent=1 // pred_check
      _
    $region19: #{tpu_custom_call.1} parent=1 // pred_check_branch
      %47 = sbr.rel (0) target = $region21
    $region20: #{tpu_custom_call.1} parent=1 // pred_region
      _
    $region21: #{tpu_custom_call.1} parent=1 // pred_fallthru
      _
    // Predicated region
    $region22: #{tpu_custom_call.1} parent=1 // pred_check
      _
    $region23: #{tpu_custom_call.1} parent=1 // pred_check_branch
      %49 = sbr.rel (0) target = $region25
    $region24: #{tpu_custom_call.1} parent=1 // pred_region
      %50 = dma.done [#allocation5], 16
    $region25: #{tpu_custom_call.1} parent=1 // pred_fallthru
      _
    // Predicated region
    $region26: #{tpu_custom_call.1} parent=1 // pred_check
      _
    $region27: #{tpu_custom_call.1} parent=1 // pred_check_branch
      %52 = sbr.rel (0) target = $region29
    $region28: #{tpu_custom_call.1} parent=1 // pred_region
      %53 = dma.done [#allocation7], 16
    $region29: #{tpu_custom_call.1} parent=1 // pred_fallthru
      _
    // Predicated region
    $region30: #{tpu_custom_call.1} parent=1 // pred_check
      _
    $region31: #{tpu_custom_call.1} parent=1 // pred_check_branch
      %55 = sbr.rel (0) target = $region33
    $region32: #{tpu_custom_call.1} parent=1 // pred_region
      %56 = dma.done [#allocation7], 16
    $region33: #{tpu_custom_call.1} parent=1 // pred_fallthru
      _
    %57 = sfence
    %s58 = sld [smem:[#allocation3]]
    %s59 = sld [smem:[#allocation3 + $0x1]]
    %s60 = sld [smem:[#allocation3 + $0x2]]
    %s61 = sld [smem:[#allocation3 + $0x3]]
    %s62 = sld [smem:[#allocation3 + $0x4]]
    %s63 = sld [smem:[#allocation3 + $0x5]]
    %s64 = sld [smem:[#allocation3 + $0x6]]
    %s65 = sld [smem:[#allocation3 + $0x7]]
    %s66 = sld [smem:[#allocation3 + $0x8]]
    %s67 = sld [smem:[#allocation3 + $0x9]]
    %s68 = sld [smem:[#allocation6]]
    %s69 = sld [smem:[#allocation6 + $0x1]]
    %s70 = sld [smem:[#allocation6 + $0x2]]
    %s71 = sld [smem:[#allocation6 + $0x3]]
    %s72 = sld [smem:[#allocation6 + $0x4]]
    %s73 = sld [smem:[#allocation6 + $0x5]]
    %s74 = sld [smem:[#allocation6 + $0x6]]
    %s75 = sld [smem:[#allocation6 + $0x7]]
    %s76 = sld [smem:[#allocation6 + $0x8]]
    %s77 = sld [smem:[#allocation6 + $0x9]]
    %s78 = sld [smem:[#allocation8]]
    %s79 = sld [smem:[#allocation8 + $0x1]]
    %s80 = sld [smem:[#allocation8 + $0x2]]
    %s81 = sld [smem:[#allocation8 + $0x3]]
    %s82 = sld [smem:[#allocation8 + $0x4]]
    %s83 = sld [smem:[#allocation8 + $0x5]]
    %s84 = sld [smem:[#allocation8 + $0x6]]
    %s85 = sld [smem:[#allocation8 + $0x7]]
    %s86 = sld [smem:[#allocation8 + $0x8]]
    %s87 = sld [smem:[#allocation8 + $0x9]]
    %s88 = sld [smem:[#allocation2]]
    %v89 = vld [vmem:[%s0] sm:$0x1]
    %v90 = vstv %s88
    %v91 = vstv %s58
    %v92 = vmul.f32 %v91, %v89
    %v93 = vstv %s68
    %v94 = vadd.f32 %v92, %v93
    %v95 = vmax.f32 %v94, 0.0
    %v96 = vstv %s78
    %v97 = vmul.f32 %v96, %v95
    %v98 = vadd.f32 %v90, %v97
    %v99 = vstv %s59
    %v100 = vmul.f32 %v99, %v89
    %v101 = vstv %s69
    %v102 = vadd.f32 %v100, %v101
    %v103 = vmax.f32 %v102, 0.0
    %v104 = vstv %s79
    %v105 = vmul.f32 %v104, %v103
    %v106 = vadd.f32 %v98, %v105
    %v107 = vstv %s60
    %v108 = vmul.f32 %v107, %v89
    %v109 = vstv %s70
    %v110 = vadd.f32 %v108, %v109
    %v111 = vmax.f32 %v110, 0.0
    %v112 = vstv %s80
    %v113 = vmul.f32 %v112, %v111
    %v114 = vadd.f32 %v106, %v113
    %v115 = vstv %s61
    %v116 = vmul.f32 %v115, %v89
    %v117 = vstv %s71
    %v118 = vadd.f32 %v116, %v117
    %v119 = vmax.f32 %v118, 0.0
    %v120 = vstv %s81
    %v121 = vmul.f32 %v120, %v119
    %v122 = vadd.f32 %v114, %v121
    %v123 = vstv %s62
    %v124 = vmul.f32 %v123, %v89
    %v125 = vstv %s72
    %v126 = vadd.f32 %v124, %v125
    %v127 = vmax.f32 %v126, 0.0
    %v128 = vstv %s82
    %v129 = vmul.f32 %v128, %v127
    %v130 = vadd.f32 %v122, %v129
    %v131 = vstv %s63
    %v132 = vmul.f32 %v131, %v89
    %v133 = vstv %s73
    %v134 = vadd.f32 %v132, %v133
    %v135 = vmax.f32 %v134, 0.0
    %v136 = vstv %s83
    %v137 = vmul.f32 %v136, %v135
    %v138 = vadd.f32 %v130, %v137
    %v139 = vstv %s64
    %v140 = vmul.f32 %v139, %v89
    %v141 = vstv %s74
    %v142 = vadd.f32 %v140, %v141
    %v143 = vmax.f32 %v142, 0.0
    %v144 = vstv %s84
    %v145 = vmul.f32 %v144, %v143
    %v146 = vadd.f32 %v138, %v145
    %v147 = vstv %s65
    %v148 = vmul.f32 %v147, %v89
    %v149 = vstv %s75
    %v150 = vadd.f32 %v148, %v149
    %v151 = vmax.f32 %v150, 0.0
    %v152 = vstv %s85
    %v153 = vmul.f32 %v152, %v151
    %v154 = vadd.f32 %v146, %v153
    %v155 = vstv %s66
    %v156 = vmul.f32 %v155, %v89
    %v157 = vstv %s76
    %v158 = vadd.f32 %v156, %v157
    %v159 = vmax.f32 %v158, 0.0
    %v160 = vstv %s86
    %v161 = vmul.f32 %v160, %v159
    %v162 = vadd.f32 %v154, %v161
    %v163 = vstv %s67
    %v164 = vmul.f32 %v163, %v89
    %v165 = vstv %s77
    %v166 = vadd.f32 %v164, %v165
    %v167 = vmax.f32 %v166, 0.0
    %v168 = vstv %s87
    %v169 = vmul.f32 %v168, %v167
    %v170 = vadd.f32 %v162, %v169
    %171 = vst [vmem:[#allocation9] sm:$0x1] %v170
    // Predicated region
    $region34: #{tpu_custom_call.1} parent=1 // pred_check
      _
    $region35: #{tpu_custom_call.1} parent=1 // pred_check_branch
      %173 = sbr.rel (0) target = $region37
    $region36: #{tpu_custom_call.1} parent=1 // pred_region
      %s175 = ssub.s32 16, 16
      %176 = vsyncadd [#allocation4], %s175
      %s178 = sshll.u32 [#allocation9], 4
      %s179 = int_to_ptr.vmem [resolvable:$true] %s178
      %181 = dma.vmem_to_hbm [thread:$0]  %s179, 16, %s5, [#allocation4]
    $region37: #{tpu_custom_call.1} parent=1 // pred_fallthru
      _
    // Predicated region
    $region38: #{tpu_custom_call.1} parent=1 // pred_check
      _
    $region39: #{tpu_custom_call.1} parent=1 // pred_check_branch
      %183 = sbr.rel (0) target = $region41
    $region40: #{tpu_custom_call.1} parent=1 // pred_region
      %184 = dma.done [#allocation4], 16
    $region41: #{tpu_custom_call.1} parent=1 // pred_fallthru
      _
    %185 = vsyncpa [#allocation4], 1
    %186 = vsyncpa [#allocation5], 1
    %187 = vsyncpa [#allocation7], 1

</llo_original>
